<compile_context>
chip_gen: v5e
topology: v5e:2x2
jax: 0.10.0
libtpu: 0.0.40
codegen_flags: <defaults>
</compile_context>

<pallas_src>
import jax
import jax.numpy as jnp
from jax.experimental import pallas as pl
from jax.experimental.pallas import tpu as pltpu

LANES = 128
SUBLANES = 8
VREG_ELEMS = SUBLANES * LANES          # 1024
MAX_ROW_TILE = 8192                    # (8192,128) f32 = 4 MiB per stream per tile
NUM_SPLITS = 2                         # leading "parallel" axis; both TCs on v7x
VMEM_LIMIT_BYTES = 32 * 1024 * 1024    # 16 MiB of input buffers fits everywhere


def _make_focal_kernel(alpha, gamma, row_tile, inner, total_blocks, tail_rem,
                       binary_targets):
    alpha = float(alpha)
    gamma = float(gamma)
    last_block = total_blocks - 1
    # Does the last data block contain invalid (padded / overhanging) elements?
    needs_mask = tail_rem != row_tile * LANES

    def tile_partial(x_ref, t_ref, masked):
        x = x_ref[...].astype(jnp.float32)
        t = t_ref[...].astype(jnp.float32)

        # Stable softplus: sp = log(1 + e^x)
        #   log(sigmoid(x)) = x - sp ,  log(1 - sigmoid(x)) = -sp
        sp = jnp.maximum(x, 0.0) + jnp.log1p(jnp.exp(-jnp.abs(x)))

        if binary_targets:
            # Exact algebraic simplification for t in {0, 1} (matches the
            # clamped torch.binary_cross_entropy result bit-for-bit in math,
            # with better numerics than sigmoid->log).
            tx = t * x
            bce = jnp.minimum(sp - tx, 100.0)       # clamp at -100 on the log
            log_omp = (x - tx) - sp                 # log(1 - pt)
        else:
            # General (soft-label capable) form, faithful to the module.
            log_p = x - sp
            log_1mp = -sp
            bce = -(t * jnp.maximum(log_p, -100.0)
                    + (1.0 - t) * jnp.maximum(log_1mp, -100.0))
            log_omp = jnp.where(t == 1.0, log_1mp, log_p)

        omp = jnp.exp(log_omp)                      # 1 - pt
        if gamma == 2.0:                            # static specialization
            mod = omp * omp
        else:
            mod = omp ** gamma
        focal = alpha * mod * bce

        if masked:
            # Only the last data block: zero out pad / overhang elements.
            # tail_rem is a small Python int (<= row_tile*128), no overflow.
            row_ids = jax.lax.broadcasted_iota(jnp.int32, (row_tile, LANES), 0)
            lane_ids = jax.lax.broadcasted_iota(jnp.int32, (row_tile, LANES), 1)
            valid = (row_ids * LANES + lane_ids) < tail_rem
            focal = jnp.where(valid, focal, 0.0)

        # Reduce only down to (8,128) with cheap VALU adds (no XLU here).
        return jnp.sum(focal.reshape(row_tile // SUBLANES, SUBLANES, LANES),
                       axis=0)

    def kernel(x_ref, t_ref, out_ref):
        c = pl.program_id(0)
        i = pl.program_id(1)
        block_idx = c * inner + i

        @pl.when(i == 0)
        def _():
            out_ref[...] = jnp.zeros_like(out_ref)

        if needs_mask:
            @pl.when(block_idx < last_block)        # fast path: no mask work
            def _():
                out_ref[...] += tile_partial(x_ref, t_ref, masked=False)

            @pl.when(block_idx == last_block)       # tail block: masked
            def _():
                out_ref[...] += tile_partial(x_ref, t_ref, masked=True)
        else:
            @pl.when(block_idx <= last_block)       # everything fully valid
            def _():
                out_ref[...] += tile_partial(x_ref, t_ref, masked=False)
        # block_idx > last_block: phantom block of the last split -> no-op.

    return kernel


def focal_loss_pallas(outputs, targets, alpha=0.25, gamma=2.0,
                      binary_targets=True):
    assert outputs.shape == targets.shape
    total = int(outputs.size)
    assert total > 0

    # Pass inputs through in their native dtype (kernel upcasts per tile).
    x = outputs.reshape(-1)
    t = targets.reshape(-1)

    # Pad only to a vreg multiple (<= 1023 elements); skip when aligned.
    padded = pl.cdiv(total, VREG_ELEMS) * VREG_ELEMS
    pad = padded - total
    if pad:
        x = jnp.pad(x, (0, pad))
        t = jnp.pad(t, (0, pad))
    rows = padded // LANES                         # multiple of 8
    x = x.reshape(rows, LANES)
    t = t.reshape(rows, LANES)

    row_tile = min(MAX_ROW_TILE, rows)             # multiple of 8
    total_blocks = pl.cdiv(rows, row_tile)         # last block may be partial
    inner = pl.cdiv(total_blocks, NUM_SPLITS)      # per-split inner steps
    last_block = total_blocks - 1
    tail_rem = total - last_block * row_tile * LANES  # valid elems in last block

    grid = (NUM_SPLITS, inner)

    def in_map(c, i):
        # Clamp so the (at most one) phantom block of the last split maps to a
        # real block; its contribution is skipped inside the kernel.
        return (jnp.minimum(c * inner + i, last_block), 0)

    in_spec = pl.BlockSpec((row_tile, LANES), in_map)

    bytes_accessed = (x.size * x.dtype.itemsize
                      + t.size * t.dtype.itemsize
                      + NUM_SPLITS * SUBLANES * LANES * 4)

    partials = pl.pallas_call(
        _make_focal_kernel(alpha, gamma, row_tile, inner, total_blocks,
                           tail_rem, binary_targets),
        out_shape=jax.ShapeDtypeStruct((NUM_SPLITS * SUBLANES, LANES),
                                       jnp.float32),
        grid_spec=pltpu.PrefetchScalarGridSpec(
            num_scalar_prefetch=0,
            grid=grid,
            in_specs=[in_spec, in_spec],
            out_specs=pl.BlockSpec((SUBLANES, LANES), lambda c, i: (c, 0)),
        ),
        compiler_params=pltpu.CompilerParams(
            dimension_semantics=("parallel", "arbitrary"),
            vmem_limit_bytes=VMEM_LIMIT_BYTES,
        ),
        cost_estimate=pl.CostEstimate(
            flops=16 * total,
            transcendentals=3 * total,
            bytes_accessed=bytes_accessed,
        ),
    )(x, t)

    # Single cross-lane/core reduce + mean, done once outside the kernel.
    return jnp.sum(partials) / jnp.float32(total)


def focal_loss_ref(outputs, targets, alpha=0.25, gamma=2.0):
    p = jax.nn.sigmoid(outputs.astype(jnp.float32))
    t = targets.astype(jnp.float32)
    bce = -(t * jnp.maximum(jnp.log(p), -100.0)
            + (1.0 - t) * jnp.maximum(jnp.log(1.0 - p), -100.0))
    pt = jnp.where(t == 1.0, p, 1.0 - p)
    return jnp.mean(alpha * (1.0 - pt) ** gamma * bce)


if __name__ == "__main__":
    key = jax.random.PRNGKey(0)
    k1, k2 = jax.random.split(key)

    # NCHW-shaped logits and binary targets, as the module's forward implies.
    outputs = jax.random.normal(k1, (2, 4, 16, 16), dtype=jnp.float32)
    targets = jax.random.bernoulli(k2, 0.5, (2, 4, 16, 16)).astype(jnp.float32)

    loss = jax.block_until_ready(focal_loss_pallas(outputs, targets))
    ref = jax.block_until_ready(focal_loss_ref(outputs, targets))

    assert jnp.allclose(loss, ref, rtol=1e-5, atol=1e-6), (loss, ref)
    print("KERNEL_OK")
</pallas_src>

<mosaic_0001>
module attributes {stable_mosaic.version = 11 : i64} {
  func.func @kernel(%arg0: i32, %arg1: i32, %arg2: memref<16x128xf32, #tpu.memory_space<vmem>>, %arg3: memref<16x128xf32, #tpu.memory_space<vmem>>, %arg4: memref<8x128xf32, #tpu.memory_space<vmem>>) attributes {dimension_semantics = [#tpu.dimension_semantics<parallel>, #tpu.dimension_semantics<arbitrary>], iteration_bounds = array<i64: 2, 1>, scalar_prefetch = 0 : i64, scratch_operands = 0 : i64, tpu.core_type = #tpu.core_type<tc>, window_params = [{transform_indices = @transform_0, window_bounds = array<i64: 16, 128>}, {transform_indices = @transform_1, window_bounds = array<i64: 16, 128>}, {transform_indices = @transform_2, window_bounds = array<i64: 8, 128>}]} {
    %c1_i32 = arith.constant 1 : i32
    %0 = arith.muli %arg0, %c1_i32 : i32
    %1 = arith.addi %0, %arg1 : i32
    %c0_i32 = arith.constant 0 : i32
    %2 = arith.cmpi eq, %arg1, %c0_i32 : i32
    %3 = arith.extui %2 : i1 to i32
    %c0_i32_0 = arith.constant 0 : i32
    %4 = arith.cmpi ne, %3, %c0_i32_0 : i32
    scf.if %4 {
      %cst = arith.constant 0.000000e+00 : f32
      %8 = vector.broadcast %cst : f32 to vector<8x128xf32>
      %c0 = arith.constant 0 : index
      %c0_3 = arith.constant 0 : index
      %9 = vector.load %arg4[%c0, %c0_3] : memref<8x128xf32, #tpu.memory_space<vmem>>, vector<8x128xf32>
      tpu.vector_store %arg4[%c0, %c0_3], %8 {strides = array<i32>} : memref<8x128xf32, #tpu.memory_space<vmem>>, vector<8x128xf32>,
    } else {
    }
    %c0_i32_1 = arith.constant 0 : i32
    %5 = arith.cmpi sle, %1, %c0_i32_1 : i32
    %6 = arith.extui %5 : i1 to i32
    %c0_i32_2 = arith.constant 0 : i32
    %7 = arith.cmpi ne, %6, %c0_i32_2 : i32
    scf.if %7 {
      %c0 = arith.constant 0 : index
      %c0_3 = arith.constant 0 : index
      %8 = vector.load %arg4[%c0, %c0_3] : memref<8x128xf32, #tpu.memory_space<vmem>>, vector<8x128xf32>
      %c0_4 = arith.constant 0 : index
      %c0_5 = arith.constant 0 : index
      %9 = vector.load %arg2[%c0_4, %c0_5] : memref<16x128xf32, #tpu.memory_space<vmem>>, vector<16x128xf32>
      %c0_6 = arith.constant 0 : index
      %c0_7 = arith.constant 0 : index
      %10 = vector.load %arg3[%c0_6, %c0_7] : memref<16x128xf32, #tpu.memory_space<vmem>>, vector<16x128xf32>
      %cst = arith.constant 0.000000e+00 : f32
      %11 = vector.broadcast %cst : f32 to vector<16x128xf32>
      %12 = arith.maximumf %9, %11 : vector<16x128xf32>
      %13 = math.absf %9 : vector<16x128xf32>
      %cst_8 = arith.constant 0.000000e+00 : f32
      %14 = vector.broadcast %cst_8 : f32 to vector<16x128xf32>
      %15 = arith.subf %14, %13 : vector<16x128xf32>
      %16 = math.exp %15 : vector<16x128xf32>
      %17 = math.log1p %16 : vector<16x128xf32>
      %18 = arith.addf %12, %17 : vector<16x128xf32>
      %19 = arith.mulf %10, %9 : vector<16x128xf32>
      %20 = arith.subf %18, %19 : vector<16x128xf32>
      %cst_9 = arith.constant 1.000000e+02 : f32
      %21 = vector.broadcast %cst_9 : f32 to vector<16x128xf32>
      %22 = arith.minimumf %20, %21 : vector<16x128xf32>
      %23 = arith.subf %9, %19 : vector<16x128xf32>
      %24 = arith.subf %23, %18 : vector<16x128xf32>
      %25 = math.exp %24 : vector<16x128xf32>
      %26 = arith.mulf %25, %25 : vector<16x128xf32>
      %cst_10 = arith.constant 2.500000e-01 : f32
      %27 = vector.broadcast %cst_10 : f32 to vector<16x128xf32>
      %28 = arith.mulf %27, %26 : vector<16x128xf32>
      %29 = arith.mulf %28, %22 : vector<16x128xf32>
      %30 = vector.shape_cast %29 : vector<16x128xf32> to vector<2x8x128xf32>
      %cst_11 = arith.constant dense<0.000000e+00> : vector<8x128xf32>
      %31 = vector.multi_reduction <add>, %30, %cst_11 [0] : vector<2x8x128xf32> to vector<8x128xf32>
      %32 = arith.addf %8, %31 : vector<8x128xf32>
      %c0_12 = arith.constant 0 : index
      %c0_13 = arith.constant 0 : index
      %33 = vector.load %arg4[%c0_12, %c0_13] : memref<8x128xf32, #tpu.memory_space<vmem>>, vector<8x128xf32>
      tpu.vector_store %arg4[%c0_12, %c0_13], %32 {strides = array<i32>} : memref<8x128xf32, #tpu.memory_space<vmem>>, vector<8x128xf32>,
    } else {
    }
    return
  }
  func.func @transform_0(%arg0: i32, %arg1: i32) -> (i32, i32) {
    %c1_i32 = arith.constant 1 : i32
    %0 = arith.muli %arg0, %c1_i32 : i32
    %1 = arith.addi %0, %arg1 : i32
    %c0_i32 = arith.constant 0 : i32
    %2 = arith.minsi %1, %c0_i32 : i32
    %c0_i32_0 = arith.constant 0 : i32
    %c0_i32_1 = arith.constant 0 : i32
    return %2, %c0_i32_0 : i32, i32
  }
  func.func @transform_1(%arg0: i32, %arg1: i32) -> (i32, i32) {
    %c1_i32 = arith.constant 1 : i32
    %0 = arith.muli %arg0, %c1_i32 : i32
    %1 = arith.addi %0, %arg1 : i32
    %c0_i32 = arith.constant 0 : i32
    %2 = arith.minsi %1, %c0_i32 : i32
    %c0_i32_0 = arith.constant 0 : i32
    %c0_i32_1 = arith.constant 0 : i32
    return %2, %c0_i32_0 : i32, i32
  }
  func.func @transform_2(%arg0: i32, %arg1: i32) -> (i32, i32) {
    %c0_i32 = arith.constant 0 : i32
    %c0_i32_0 = arith.constant 0 : i32
    return %arg0, %c0_i32 : i32, i32
  }
}

</mosaic_0001>

<llo_original>
// kernel: tpu_custom_call.1
$region0: #{tpu_custom_call.1}
  #allocation0 [shape = 'u32[]', space=smem, size = 0x4, offset = 0x4, fixed_abs, tag = 'smem constant byte address 0x4 - core index']
  #allocation1 [shape = 'u32[72,128]{1,0:T(1,128)}', space=vmem, size = 0x9000, scoped, tag = 'internal scratch']
  %s0 = inlined_call_operand.hbm [shape: f32[16,128], index: 0, kind: input, shape index: {}]
  %s1 = inlined_call_operand.hbm [shape: f32[16,128], index: 1, kind: input, shape index: {}]
  %s2 = inlined_call_operand.hbm [shape: f32[16,128], index: 2, kind: output, shape index: {}]
  %s3 = sld [smem:[#allocation0]]
  $region57: #{tpu_custom_call.1} parent=0
    _
  %s5 = ssub.s32 1, %s3
  %s6 = scalar_select 0, %s5, %s3
  $region1: #{tpu_custom_call.1} parent=0
    #allocation2 [shape = 'u8[16384]{0}', space=vmem, size = 0x4000, scoped, tag = 'input window, operand 0']
    #allocation3 [shape = 's32[2]{0}', space=sflag, size = 0x8, scoped, tag = 'scoped memory for tpu_custom_call.1']
    #allocation4 [shape = 's32[2]{0}', space=sflag, size = 0x8, scoped, tag = 'scoped memory for tpu_custom_call.1']
    #allocation5 [shape = 'u8[16384]{0}', space=vmem, size = 0x4000, scoped, tag = 'input window, operand 1']
    #allocation6 [shape = 's32[2]{0}', space=sflag, size = 0x8, scoped, tag = 'scoped memory for tpu_custom_call.1']
    #allocation7 [shape = 'u8[8192]{0}', space=vmem, size = 0x2000, scoped, tag = 'output window, operand 0']
    %7 = vsyncpa [#allocation3], 0
    %s8 = scalar_lea.sflag [#allocation3], 1
    %9 = vsyncpa %s8, 0
    %10 = vsyncpa [#allocation6], 0
    %s11 = scalar_lea.sflag [#allocation6], 1
    %12 = vsyncpa %s11, 0
    %13 = vsyncpa [#allocation4], 0
    %s14 = scalar_lea.sflag [#allocation4], 1
    %15 = vsyncpa %s14, 0
    loop: start=0, step=1, limit=4
    $region2: #{tpu_custom_call.1} parent=1 // loop_pre_header
      _
    $region3: #{tpu_custom_call.1} parent=1 // loop_header
      %s17 = sphi 0, %s21
      %p18 = scmp.ge.s32.totalorder %s17, 4
      %s24 = sphi 0, %s36
      %s25 = sphi 0, %s32
      %s26 = sphi 0, %s24
      %s27 = sphi 0, %s25
      %s28 = sphi 0, %s26
      %s29 = sphi 0, %s27
      %s45 = sphi 0, %s47
      %s48 = sphi 0, %s45
      %s49 = sphi 0, %s48
      %s65 = sphi 0, %s49
      %s77 = sphi 0, %s79
      %s80 = sphi 0, %s77
      %s81 = sphi 0, %s80
      %s97 = sphi 0, %s81
      %s103 = sphi 0, %s105
      %s106 = sphi 0, %s103
      %s107 = sphi 0, %s106
      %s123 = sphi 0, %s107
    $region4: #{tpu_custom_call.1} parent=1 // loop_header_branch
      %20 = sbr.rel (%p18) target = $region8
    $region5: #{tpu_custom_call.1} parent=1 // loop_body
      %s22 = ssub.s32 %s17, 1
      %s23 = ssub.s32 %s17, 2
      %s30 = sadd.s32 1, %s25
      %p31 = scmp.ge.s32.totalorder %s30, 1
      %s32 = scalar_select %p31, 0, %s30
      %s33 = sadd.s32 1, %s24
      %s34 = scalar_select %p31, %s33, %s24
      %p35 = scmp.ge.s32.totalorder %s34, 2
      %s36 = scalar_select %p35, 0, %s34
      %s37 = sadd.s32 %s24, %s25
      %p38 = scmp.lt.s32.totalorder %s37, 0
      %s39 = scalar_select %p38, %s37, 0
      %s40 = sadd.s32 %s36, %s32
      %p41 = scmp.lt.s32.totalorder %s40, 0
      %s42 = scalar_select %p41, %s40, 0
      %s43 = ssub.s32 %s39, %s42
      %p44 = scmp.eq.s32.totalorder %s43, 0
      %s46 = sadd.s32 %s45, 1
      %s47 = scalar_select %p44, %s45, %s46
      %p50 = pneg %p44
      %p51 = scmp.eq.s32.totalorder %s17, 1
      %p52 = por %p50, %p51
      %p53 = scmp.ne.s32.totalorder %s45, %s48
      %p54 = scmp.eq.s32.totalorder %s17, 0
      %p55 = por %p53, %p54
      %p56 = scmp.ne.s32.totalorder %s45, %s48
      %p57 = scmp.eq.s32.totalorder %s22, 1
      %p58 = por %p56, %p57
      %p59 = scmp.ne.s32.totalorder %s48, %s49
      %p60 = scmp.eq.s32.totalorder %s22, 0
      %p61 = por %p59, %p60
      %p62 = scmp.ne.s32.totalorder %s48, %s49
      %p63 = scmp.eq.s32.totalorder %s23, 1
      %p64 = por %p62, %p63
      %p66 = scmp.ne.s32.totalorder %s49, %s65
      %p67 = scmp.eq.s32.totalorder %s23, 0
      %p68 = por %p66, %p67
      %s69 = sadd.s32 %s24, %s25
      %p70 = scmp.lt.s32.totalorder %s69, 0
      %s71 = scalar_select %p70, %s69, 0
      %s72 = sadd.s32 %s36, %s32
      %p73 = scmp.lt.s32.totalorder %s72, 0
      %s74 = scalar_select %p73, %s72, 0
      %s75 = ssub.s32 %s71, %s74
      %p76 = scmp.eq.s32.totalorder %s75, 0
      %s78 = sadd.s32 %s77, 1
      %s79 = scalar_select %p76, %s77, %s78
      %p82 = pneg %p76
      %p83 = scmp.eq.s32.totalorder %s17, 1
      %p84 = por %p82, %p83
      %p85 = scmp.ne.s32.totalorder %s77, %s80
      %p86 = scmp.eq.s32.totalorder %s17, 0
      %p87 = por %p85, %p86
      %p88 = scmp.ne.s32.totalorder %s77, %s80
      %p89 = scmp.eq.s32.totalorder %s22, 1
      %p90 = por %p88, %p89
      %p91 = scmp.ne.s32.totalorder %s80, %s81
      %p92 = scmp.eq.s32.totalorder %s22, 0
      %p93 = por %p91, %p92
      %p94 = scmp.ne.s32.totalorder %s80, %s81
      %p95 = scmp.eq.s32.totalorder %s23, 1
      %p96 = por %p94, %p95
      %p98 = scmp.ne.s32.totalorder %s81, %s97
      %p99 = scmp.eq.s32.totalorder %s23, 0
      %p100 = por %p98, %p99
      %s101 = ssub.s32 %s24, %s36
      %p102 = scmp.eq.s32.totalorder %s101, 0
      %s104 = sadd.s32 %s103, 1
      %s105 = scalar_select %p102, %s103, %s104
      %p108 = pneg %p102
      %p109 = scmp.eq.s32.totalorder %s17, 1
      %p110 = por %p108, %p109
      %p111 = scmp.ne.s32.totalorder %s103, %s106
      %p112 = scmp.eq.s32.totalorder %s17, 0
      %p113 = por %p111, %p112
      %p114 = scmp.ne.s32.totalorder %s103, %s106
      %p115 = scmp.eq.s32.totalorder %s22, 1
      %p116 = por %p114, %p115
      %p117 = scmp.ne.s32.totalorder %s106, %s107
      %p118 = scmp.eq.s32.totalorder %s22, 0
      %p119 = por %p117, %p118
      %p120 = scmp.ne.s32.totalorder %s106, %s107
      %p121 = scmp.eq.s32.totalorder %s23, 1
      %p122 = por %p120, %p121
      %p124 = scmp.ne.s32.totalorder %s107, %s123
      %p125 = scmp.eq.s32.totalorder %s23, 0
      %p126 = por %p124, %p125
      %p127 = scmp.le.s32.totalorder 1, %s17
      %p128 = scmp.lt.s32.totalorder %s17, 3
      %p129 = pnand %p127, %p128
      %p130 = pneg %p129
      // Predicated region
      $region9: #{tpu_custom_call.1} parent=5 // pred_check
        _
      $region10: #{tpu_custom_call.1} parent=5 // pred_check_branch
        %132 = sbr.rel (%p129) target = $region12
      $region11: #{tpu_custom_call.1} parent=5 // pred_region
        %s133 = ssub.s32 %s17, 1
      $region12: #{tpu_custom_call.1} parent=5 // pred_fallthru
        _
      %p134 = scmp.lt.s32.totalorder %s17, 2
      // Predicated region
      $region13: #{tpu_custom_call.1} parent=5 // pred_check
        %p135 = pneg %p134
      $region14: #{tpu_custom_call.1} parent=5 // pred_check_branch
        %137 = sbr.rel (%p135) target = $region16
      $region15: #{tpu_custom_call.1} parent=5 // pred_region
        // Predicated region
        $region17: #{tpu_custom_call.1} parent=15 // pred_check
          %p138 = pneg %p55
        $region18: #{tpu_custom_call.1} parent=15 // pred_check_branch
          %140 = sbr.rel (%p138) target = $region20
        $region19: #{tpu_custom_call.1} parent=15 // pred_region
          %s141 = sand.u32 %s45, 1
          %s142 = scalar_lea.sflag [#allocation3], %s141
          %s143 = sand.u32 %s45, 1
          %s144 = smul.addr %s143, 16
          %s145 = scalar_lea.vmem [#allocation2], %s144
          %s146 = sadd.s32 %s24, %s25
          %p147 = scmp.lt.s32.totalorder %s146, 0
          %s148 = scalar_select %p147, %s146, 0
          %s149 = smul.u32 2, %s148
          %151 = vsyncadd %s142, 0
          %s152 = smul.addr %s149, 8
          %s153 = scalar_lea.hbm %s0, %s152
          %s154 = sshll.u32 %s153, 4
          %s155 = int_to_ptr.hbm [resolvable:$true] %s154
          %s156 = sshll.u32 %s145, 4
          %s157 = int_to_ptr.vmem [resolvable:$true] %s156
          %162 = dma.hbm_to_vmem [thread:$0]  %s155, 256, %s157, %s142, 128, 128, 8
        $region20: #{tpu_custom_call.1} parent=15 // pred_fallthru
          _
        // Predicated region
        $region21: #{tpu_custom_call.1} parent=15 // pred_check
          %p163 = pneg %p87
        $region22: #{tpu_custom_call.1} parent=15 // pred_check_branch
          %165 = sbr.rel (%p163) target = $region24
        $region23: #{tpu_custom_call.1} parent=15 // pred_region
          %s166 = sand.u32 %s77, 1
          %s167 = scalar_lea.sflag [#allocation6], %s166
          %s168 = sand.u32 %s77, 1
          %s169 = smul.addr %s168, 16
          %s170 = scalar_lea.vmem [#allocation5], %s169
          %s171 = sadd.s32 %s24, %s25
          %p172 = scmp.lt.s32.totalorder %s171, 0
          %s173 = scalar_select %p172, %s171, 0
          %s174 = smul.u32 2, %s173
          %176 = vsyncadd %s167, 0
          %s177 = smul.addr %s174, 8
          %s178 = scalar_lea.hbm %s1, %s177
          %s179 = sshll.u32 %s178, 4
          %s180 = int_to_ptr.hbm [resolvable:$true] %s179
          %s181 = sshll.u32 %s170, 4
          %s182 = int_to_ptr.vmem [resolvable:$true] %s181
          %187 = dma.hbm_to_vmem [thread:$0]  %s180, 256, %s182, %s167, 128, 128, 8
        $region24: #{tpu_custom_call.1} parent=15 // pred_fallthru
          _
      $region16: #{tpu_custom_call.1} parent=5 // pred_fallthru
        _
      %p188 = scmp.le.s32.totalorder 1, %s17
      %p189 = scmp.lt.s32.totalorder %s17, 3
      %p190 = pnand %p188, %p189
      %p191 = pneg %p190
      // Predicated region
      $region25: #{tpu_custom_call.1} parent=5 // pred_check
        _
      $region26: #{tpu_custom_call.1} parent=5 // pred_check_branch
        %193 = sbr.rel (%p190) target = $region28
      $region27: #{tpu_custom_call.1} parent=5 // pred_region
        %s194 = ssub.s32 %s17, 1
        %s195 = sand.u32 %s48, 1
        %s196 = scalar_lea.sflag [#allocation3], %s195
        %s197 = sand.u32 %s48, 1
        %s198 = smul.addr %s197, 16
        %s199 = scalar_lea.vmem [#allocation2], %s198
        // Predicated region
        $region29: #{tpu_custom_call.1} parent=27 // pred_check
          %p200 = pneg %p61
        $region30: #{tpu_custom_call.1} parent=27 // pred_check_branch
          %202 = sbr.rel (%p200) target = $region32
        $region31: #{tpu_custom_call.1} parent=27 // pred_region
          %204 = dma.done %s196, 256
        $region32: #{tpu_custom_call.1} parent=27 // pred_fallthru
          _
        %s205 = sand.u32 %s80, 1
        %s206 = scalar_lea.sflag [#allocation6], %s205
        %s207 = sand.u32 %s80, 1
        %s208 = smul.addr %s207, 16
        %s209 = scalar_lea.vmem [#allocation5], %s208
        // Predicated region
        $region33: #{tpu_custom_call.1} parent=27 // pred_check
          %p210 = pneg %p93
        $region34: #{tpu_custom_call.1} parent=27 // pred_check_branch
          %212 = sbr.rel (%p210) target = $region36
        $region35: #{tpu_custom_call.1} parent=27 // pred_region
          %214 = dma.done %s206, 256
        $region36: #{tpu_custom_call.1} parent=27 // pred_fallthru
          _
        %s215 = sand.u32 %s48, 1
        %s216 = scalar_lea.sflag [#allocation3], %s215
        %s217 = sand.u32 %s48, 1
        %s218 = smul.addr %s217, 16
        %s219 = scalar_lea.vmem [#allocation2], %s218
        %p220 = pneg %p61
        %p221 = pneg %p58
        %s222 = sand.u32 %s80, 1
        %s223 = scalar_lea.sflag [#allocation6], %s222
        %s224 = sand.u32 %s80, 1
        %s225 = smul.addr %s224, 16
        %s226 = scalar_lea.vmem [#allocation5], %s225
        %p227 = pneg %p93
        %p228 = pneg %p90
        %p229 = pneg %p119
        %p230 = pneg %p116
        %s231 = sand.u32 %s106, 1
        %s232 = scalar_lea.sflag [#allocation4], %s231
        %s233 = sand.u32 %s106, 1
        %s234 = smul.addr %s233, 8
        %s235 = scalar_lea.vmem [#allocation7], %s234
        %s236 = sadd.s32 %s26, %s27
        %p237 = scmp.lt.s32.totalorder %s236, 0
        %s238 = scalar_select %p237, %s236, 0
        %s239 = smul.u32 2, %s238
        %s240 = sadd.s32 %s26, %s27
        %p241 = scmp.lt.s32.totalorder %s240, 0
        %s242 = scalar_select %p241, %s240, 0
        %s243 = smul.u32 2, %s242
        %s244 = sadd.s32 %s26, %s27
        %p245 = scmp.eq.s32.totalorder %s27, 0
        // Predicated region
        $region37: #{tpu_custom_call.1} parent=27 // pred_check
          %p246 = pneg %p245
        $region38: #{tpu_custom_call.1} parent=27 // pred_check_branch
          %248 = sbr.rel (%p246) target = $region40
        $region39: #{tpu_custom_call.1} parent=27 // pred_region
          %249 = vst [vmem:[%s235] sm:$0xff] 0.0
        $region40: #{tpu_custom_call.1} parent=27 // pred_fallthru
          _
        %p250 = scmp.le.s32.totalorder %s244, 0
        // Predicated region
        $region41: #{tpu_custom_call.1} parent=27 // pred_check
          %p251 = pneg %p250
        $region42: #{tpu_custom_call.1} parent=27 // pred_check_branch
          %253 = sbr.rel (%p251) target = $region44
        $region43: #{tpu_custom_call.1} parent=27 // pred_region
          %v254 = vld [vmem:[%s235] sm:$0xff]
          %v255 = vld [vmem:[%s199] sm:$0xff]
          %v256 = vld [vmem:[%s199 + $0x8] sm:$0xff]
          %v257 = vld [vmem:[%s209] sm:$0xff]
          %v258 = vld [vmem:[%s209 + $0x8] sm:$0xff]
          %v259 = vmax.f32 %v255, 0.0
          %v260 = vmax.f32 %v256, 0.0
          %v261 = vand.u32 2147483647, %v255
          %v262 = vand.u32 2147483647, %v256
          %v263 = vsub.f32 0.0, %v261
          %v264 = vsub.f32 0.0, %v262
          %v265 = vmul.f32 %v263, 1.442695
          %v266 = vpow.pop %v265
          %v267 = vmul.f32 %v264, 1.442695
          %v268 = vpow.pop %v267
          %v269 = vadd.f32 %v266, 1.0
          %v270 = vlog2.pop %v269
          %v271 = vmul.f32 %v270, 0.6931472
          %v272 = vmul.f32 -0.5, %v266
          %v273 = vadd.f32 %v272, 1.0
          %v274 = vmul.f32 %v273, %v266
          %v275 = vand.u32 2147483647, %v266
          %vm276 = vcmp.lt.f32.partialorder %v275, 0.0004427343
          %v277 = vsel %vm276, %v274, %v271
          %v278 = vadd.f32 %v268, 1.0
          %v279 = vlog2.pop %v278
          %v280 = vmul.f32 %v279, 0.6931472
          %v281 = vmul.f32 -0.5, %v268
          %v282 = vadd.f32 %v281, 1.0
          %v283 = vmul.f32 %v282, %v268
          %v284 = vand.u32 2147483647, %v268
          %vm285 = vcmp.lt.f32.partialorder %v284, 0.0004427343
          %v286 = vsel %vm285, %v283, %v280
          %v287 = vadd.f32 %v259, %v277
          %v288 = vadd.f32 %v260, %v286
          %v289 = vmul.f32 %v257, %v255
          %v290 = vmul.f32 %v258, %v256
          %v291 = vsub.f32 %v287, %v289
          %v292 = vsub.f32 %v288, %v290
          %v293 = vmin.f32 %v291, 100.0
          %v294 = vmin.f32 %v292, 100.0
          %v295 = vsub.f32 %v255, %v289
          %v296 = vsub.f32 %v256, %v290
          %v297 = vsub.f32 %v295, %v287
          %v298 = vsub.f32 %v296, %v288
          %v299 = vmul.f32 %v297, 1.442695
          %v300 = vpow.pop %v299
          %v301 = vmul.f32 %v298, 1.442695
          %v302 = vpow.pop %v301
          %v303 = vmul.f32 %v300, %v300
          %v304 = vmul.f32 %v302, %v302
          %v305 = vmul.f32 %v303, 0.25
          %v306 = vmul.f32 %v304, 0.25
          %v307 = vmul.f32 %v305, %v293
          %v308 = vmul.f32 %v306, %v294
          %v309 = vadd.f32 %v307, %v308
          %v310 = vadd.f32 %v254, %v309
          %311 = vst [vmem:[%s235] sm:$0xff] %v310
        $region44: #{tpu_custom_call.1} parent=27 // pred_fallthru
          _
        %s312 = sand.u32 %s106, 1
        %s313 = scalar_lea.sflag [#allocation4], %s312
        %s314 = sand.u32 %s106, 1
        %s315 = smul.addr %s314, 8
        %s316 = scalar_lea.vmem [#allocation7], %s315
        // Predicated region
        $region45: #{tpu_custom_call.1} parent=27 // pred_check
          %p317 = pneg %p116
        $region46: #{tpu_custom_call.1} parent=27 // pred_check_branch
          %319 = sbr.rel (%p317) target = $region48
        $region47: #{tpu_custom_call.1} parent=27 // pred_region
          %321 = vsyncadd %s313, 0
          %s322 = smul.addr %s26, 8
          %s323 = scalar_lea.hbm %s2, %s322
          %s325 = sshll.u32 %s316, 4
          %s326 = int_to_ptr.vmem [resolvable:$true] %s325
          %s327 = sshll.u32 %s323, 4
          %s328 = int_to_ptr.hbm [resolvable:$true] %s327
          %330 = dma.vmem_to_hbm [thread:$0]  %s326, 128, %s328, %s313
        $region48: #{tpu_custom_call.1} parent=27 // pred_fallthru
          _
      $region28: #{tpu_custom_call.1} parent=5 // pred_fallthru
        _
      %p331 = scmp.le.s32.totalorder 2, %s17
      // Predicated region
      $region49: #{tpu_custom_call.1} parent=5 // pred_check
        %p332 = pneg %p331
      $region50: #{tpu_custom_call.1} parent=5 // pred_check_branch
        %334 = sbr.rel (%p332) target = $region52
      $region51: #{tpu_custom_call.1} parent=5 // pred_region
        %s335 = ssub.s32 %s17, 2
        // Predicated region
        $region53: #{tpu_custom_call.1} parent=51 // pred_check
          %p336 = pneg %p122
        $region54: #{tpu_custom_call.1} parent=51 // pred_check_branch
          %338 = sbr.rel (%p336) target = $region56
        $region55: #{tpu_custom_call.1} parent=51 // pred_region
          %s339 = sand.u32 %s107, 1
          %s340 = scalar_lea.sflag [#allocation4], %s339
          %s341 = sand.u32 %s107, 1
          %s342 = smul.addr %s341, 8
          %s343 = scalar_lea.vmem [#allocation7], %s342
          %345 = dma.done %s340, 128
        $region56: #{tpu_custom_call.1} parent=51 // pred_fallthru
          _
      $region52: #{tpu_custom_call.1} parent=5 // pred_fallthru
        _
    $region6: #{tpu_custom_call.1} parent=1 // loop_footer
      %s21 = sadd.s32 1, %s17
    $region7: #{tpu_custom_call.1} parent=1 // loop_footer_branch
      %16 = sbr.rel target = $region3
    $region8: #{tpu_custom_call.1} parent=1 // loop_exit
      _
    %346 = vsyncpa [#allocation3], 1
    %s347 = scalar_lea.sflag [#allocation3], 1
    %348 = vsyncpa %s347, 1
    %349 = vsyncpa [#allocation6], 1
    %s350 = scalar_lea.sflag [#allocation6], 1
    %351 = vsyncpa %s350, 1
    %352 = vsyncpa [#allocation4], 1
    %s353 = scalar_lea.sflag [#allocation4], 1
    %354 = vsyncpa %s353, 1

</llo_original>
